<compile_context>
chip_gen: v7x
topology: tpu7x:2x2x1
jax: 0.10.0
libtpu: 0.0.40
codegen_flags: <defaults>
</compile_context>

<pallas_src>
import jax
import jax.numpy as jnp
from jax.experimental import pallas as pl
from jax.experimental.pallas import tpu as pltpu


def _round_up(x, m):
    return (x + m - 1) // m * m


def _planar_flow_kernel(u_ref, x_ref, w_ref, b_ref, o_ref):
    """out = x + u * tanh(x @ W_t + b) for one (tile_rows, dim) tile."""
    x = x_ref[...]                                                    # (T, D)
    h = jnp.dot(x, w_ref[...], preferred_element_type=jnp.float32)    # MXU
    h = h + b_ref[...]                                                # (1,D) bcast
    o_ref[...] = x + u_ref[0] * jnp.tanh(h)                           # EUP tanh + VPU


def planar_normalizing_flow(x, weight, bias, u, *, block_rows=256):
    """Pallas forward of PlanarNormalizingFlow.

    x:      (..., dim)            any leading dims (flattened to rows)
    weight: (dim, dim)            PyTorch nn.Linear layout (out_features, in_features)
    bias:   (dim,)
    u:      (1,) scalar parameter
    """
    orig_shape = x.shape
    dim = orig_shape[-1]

    x2 = jnp.asarray(x, jnp.float32).reshape(-1, dim)                 # (n, dim)
    n = x2.shape[0]

    w_t = jnp.asarray(weight, jnp.float32).T                          # (dim, dim): x @ W^T
    b2 = jnp.asarray(bias, jnp.float32).reshape(1, dim)               # (1, dim)
    u1 = jnp.asarray(u, jnp.float32).reshape(1)                       # (1,) -> SMEM

    # Row tiling: tiles are multiples of 8 sublanes; pad rows if needed.
    tb = min(block_rows, _round_up(n, 8))
    n_pad = _round_up(n, tb)
    if n_pad != n:
        x2 = jnp.pad(x2, ((0, n_pad - n), (0, 0)))

    out = pl.pallas_call(
        _planar_flow_kernel,
        out_shape=jax.ShapeDtypeStruct((n_pad, dim), jnp.float32),
        grid=(n_pad // tb,),
        in_specs=[
            pl.BlockSpec(memory_space=pltpu.MemorySpace.SMEM),        # u (scalar)
            pl.BlockSpec((tb, dim), lambda i: (i, 0)),                # x tile
            pl.BlockSpec((dim, dim), lambda i: (0, 0)),               # W^T (grid-invariant)
            pl.BlockSpec((1, dim), lambda i: (0, 0)),                 # bias (grid-invariant)
        ],
        out_specs=pl.BlockSpec((tb, dim), lambda i: (i, 0)),
        compiler_params=pltpu.CompilerParams(
            dimension_semantics=("parallel",)),                       # dual-TC on v7x
    )(u1, x2, w_t, b2)

    if n_pad != n:
        out = out[:n]
    return out.reshape(orig_shape)


def _reference(x, weight, bias, u):
    """Pure-JAX reference of the same forward pass."""
    h = jnp.einsum("...d,ed->...e", x, weight) + bias
    return x + u[0] * jnp.tanh(h)


if __name__ == "__main__":
    # Small shapes consistent with the module: dim = 128 (lane-dense),
    # x has leading dims (batch=2, seq=32) -> 64 rows flattened.
    B, S, DIM = 2, 32, 128

    key = jax.random.PRNGKey(0)
    kx, kw, kb, ku = jax.random.split(key, 4)

    x = jax.random.normal(kx, (B, S, DIM), jnp.float32)
    weight = 0.1 * jax.random.normal(kw, (DIM, DIM), jnp.float32)   # (out, in)
    bias = 0.1 * jax.random.normal(kb, (DIM,), jnp.float32)
    u = jax.random.normal(ku, (1,), jnp.float32)

    out = jax.block_until_ready(planar_normalizing_flow(x, weight, bias, u))
    ref = jax.block_until_ready(_reference(x, weight, bias, u))

    assert out.shape == x.shape
    max_err = float(jnp.max(jnp.abs(out - ref)))
    assert jnp.allclose(out, ref, atol=1e-4, rtol=1e-4), max_err

    print("KERNEL_OK")
</pallas_src>

<mosaic_0001>
module attributes {stable_mosaic.version = 11 : i64} {
  func.func @_planar_flow_kernel(%arg0: i32, %arg1: memref<1xf32, #tpu.memory_space<smem>>, %arg2: memref<64x128xf32, #tpu.memory_space<vmem>>, %arg3: memref<128x128xf32, #tpu.memory_space<vmem>>, %arg4: memref<1x128xf32, #tpu.memory_space<vmem>>, %arg5: memref<64x128xf32, #tpu.memory_space<vmem>>) attributes {dimension_semantics = [#tpu.dimension_semantics<parallel>], iteration_bounds = array<i64: 1>, scalar_prefetch = 0 : i64, scratch_operands = 0 : i64, tpu.core_type = #tpu.core_type<tc>, window_params = [{transform_indices = @transform_0, window_bounds = array<i64: 1>}, {transform_indices = @transform_1, window_bounds = array<i64: 64, 128>}, {pipeline_mode = #tpu.pipeline_mode<synchronous>, transform_indices = @transform_2, window_bounds = array<i64: 128, 128>}, {pipeline_mode = #tpu.pipeline_mode<synchronous>, transform_indices = @transform_3, window_bounds = array<i64: 1, 128>}, {transform_indices = @transform_4, window_bounds = array<i64: 64, 128>}]} {
    %c0 = arith.constant 0 : index
    %c0_0 = arith.constant 0 : index
    %0 = vector.load %arg2[%c0, %c0_0] : memref<64x128xf32, #tpu.memory_space<vmem>>, vector<64x128xf32>
    %c0_1 = arith.constant 0 : index
    %c0_2 = arith.constant 0 : index
    %1 = vector.load %arg3[%c0_1, %c0_2] : memref<128x128xf32, #tpu.memory_space<vmem>>, vector<128x128xf32>
    %cst = arith.constant dense<0.000000e+00> : vector<64x128xf32>
    %2 = tpu.matmul %0, %1, %cst {dimension_numbers = #tpu.dot_dimension_numbers<[1], [0], [0], [1], [0, 0, 1, 1], [], []>} : vector<64x128xf32>, vector<128x128xf32>, vector<64x128xf32> -> vector<64x128xf32>
    %c0_3 = arith.constant 0 : index
    %c0_4 = arith.constant 0 : index
    %3 = vector.load %arg4[%c0_3, %c0_4] : memref<1x128xf32, #tpu.memory_space<vmem>>, vector<1x128xf32>
    %4 = vector.broadcast %3 : vector<1x128xf32> to vector<64x128xf32>
    %5 = arith.addf %2, %4 : vector<64x128xf32>
    %c0_5 = arith.constant 0 : index
    %6 = memref.load %arg1[%c0_5] : memref<1xf32, #tpu.memory_space<smem>>
    %7 = math.tanh %5 : vector<64x128xf32>
    %8 = vector.broadcast %6 : f32 to vector<64x128xf32>
    %9 = arith.mulf %8, %7 : vector<64x128xf32>
    %10 = arith.addf %0, %9 : vector<64x128xf32>
    %c0_6 = arith.constant 0 : index
    %c0_7 = arith.constant 0 : index
    %11 = vector.load %arg5[%c0_6, %c0_7] : memref<64x128xf32, #tpu.memory_space<vmem>>, vector<64x128xf32>
    tpu.vector_store %arg5[%c0_6, %c0_7], %10 {strides = array<i32>} : memref<64x128xf32, #tpu.memory_space<vmem>>, vector<64x128xf32>,
    return
  }
  func.func @transform_0(%arg0: i32) -> i32 {
    %c0_i32 = arith.constant 0 : i32
    %c0_i32_0 = arith.constant 0 : i32
    return %c0_i32 : i32
  }
  func.func @transform_1(%arg0: i32) -> (i32, i32) {
    %c0_i32 = arith.constant 0 : i32
    %c0_i32_0 = arith.constant 0 : i32
    return %arg0, %c0_i32 : i32, i32
  }
  func.func @transform_2(%arg0: i32) -> (i32, i32) {
    %c0_i32 = arith.constant 0 : i32
    %c0_i32_0 = arith.constant 0 : i32
    %c0_i32_1 = arith.constant 0 : i32
    return %c0_i32, %c0_i32_0 : i32, i32
  }
  func.func @transform_3(%arg0: i32) -> (i32, i32) {
    %c0_i32 = arith.constant 0 : i32
    %c0_i32_0 = arith.constant 0 : i32
    %c0_i32_1 = arith.constant 0 : i32
    return %c0_i32, %c0_i32_0 : i32, i32
  }
  func.func @transform_4(%arg0: i32) -> (i32, i32) {
    %c0_i32 = arith.constant 0 : i32
    %c0_i32_0 = arith.constant 0 : i32
    return %arg0, %c0_i32 : i32, i32
  }
}

</mosaic_0001>

<llo_original>
// kernel: tpu_custom_call.1
$region0: #{tpu_custom_call.1}
  #allocation0 [shape = 'u32[]', space=smem, size = 0x4, offset = 0x4, fixed_abs, tag = 'smem constant byte address 0x4 - core index']
  #allocation1 [shape = 'u32[144,128]{1,0:T(1,128)}', space=vmem, size = 0x12000, scoped, tag = 'internal scratch']
  #allocation2 [shape = 'f32[1]{0:T(128)S(6)}', space=smem, size = 0x200, scoped, tag = 'scoped memory for tpu_custom_call.1']
  %s0 = inlined_call_operand.<no memory space> [shape: f32[1], index: 0, kind: input, shape index: {}]
  %s1 = inlined_call_operand.hbm [shape: f32[64,128], index: 1, kind: input, shape index: {}]
  %s2 = inlined_call_operand.hbm [shape: f32[128,128], index: 2, kind: input, shape index: {}]
  %s3 = inlined_call_operand.vmem [shape: f32[1,128], index: 3, kind: input, shape index: {}]
  %s4 = inlined_call_operand.hbm [shape: f32[64,128], index: 4, kind: output, shape index: {}]
  %s5 = sld [smem:[#allocation0]]
  $region34: #{tpu_custom_call.1} parent=0
    _
  %s7 = ssub.s32 1, %s5
  %s8 = scalar_select 0, %s7, %s5
  %9 = sst [smem:[#allocation2]] %s0
  $region1: #{tpu_custom_call.1} parent=0
    #allocation3 [shape = 'u8[32768]{0}', space=vmem, size = 0x8000, scoped, tag = 'input window, operand 1, single buffered']
    #allocation4 [shape = 's32[1]{0}', space=sflag, size = 0x4, scoped, tag = 'scoped memory for tpu_custom_call.1']
    #allocation5 [shape = 's32[1]{0}', space=sflag, size = 0x4, scoped, tag = 'scoped memory for tpu_custom_call.1']
    #allocation6 [shape = 'u8[65536]{0}', space=vmem, size = 0x10000, scoped, tag = 'input window, operand 2, single buffered']
    #allocation7 [shape = 's32[1]{0}', space=sflag, size = 0x4, scoped, tag = 'scoped memory for tpu_custom_call.1']
    #allocation8 [shape = 'u8[32768]{0}', space=vmem, size = 0x8000, scoped, tag = 'output window, operand 0, single buffered']
    %10 = vsyncpa [#allocation4], 0
    %11 = vsyncpa [#allocation7], 0
    %12 = vsyncpa [#allocation5], 0
    // Predicated region
    $region2: #{tpu_custom_call.1} parent=1 // pred_check
      _
    $region3: #{tpu_custom_call.1} parent=1 // pred_check_branch
      %14 = sbr.rel (0) target = $region5
    $region4: #{tpu_custom_call.1} parent=1 // pred_region
      _
    $region5: #{tpu_custom_call.1} parent=1 // pred_fallthru
      _
    // Predicated region
    $region6: #{tpu_custom_call.1} parent=1 // pred_check
      _
    $region7: #{tpu_custom_call.1} parent=1 // pred_check_branch
      %16 = sbr.rel (0) target = $region9
    $region8: #{tpu_custom_call.1} parent=1 // pred_region
      %s18 = ssub.s32 1024, 1024
      %19 = vsyncadd [#allocation4], %s18
      %s20 = sshll.u32 [#allocation3], 4
      %s21 = int_to_ptr.vmem [resolvable:$true] %s20
      %26 = dma.hbm_to_vmem [thread:$0]  %s1, 1024, %s21, [#allocation4], 128, 128, 8
    $region9: #{tpu_custom_call.1} parent=1 // pred_fallthru
      _
    // Predicated region
    $region10: #{tpu_custom_call.1} parent=1 // pred_check
      _
    $region11: #{tpu_custom_call.1} parent=1 // pred_check_branch
      %28 = sbr.rel (0) target = $region13
    $region12: #{tpu_custom_call.1} parent=1 // pred_region
      %s30 = ssub.s32 2048, 2048
      %31 = vsyncadd [#allocation7], %s30
      %s32 = sshll.u32 [#allocation6], 4
      %s33 = int_to_ptr.vmem [resolvable:$true] %s32
      %38 = dma.hbm_to_vmem [thread:$0]  %s2, 2048, %s33, [#allocation7], 128, 128, 8
    $region13: #{tpu_custom_call.1} parent=1 // pred_fallthru
      _
    // Predicated region
    $region14: #{tpu_custom_call.1} parent=1 // pred_check
      _
    $region15: #{tpu_custom_call.1} parent=1 // pred_check_branch
      %40 = sbr.rel (0) target = $region17
    $region16: #{tpu_custom_call.1} parent=1 // pred_region
      _
    $region17: #{tpu_custom_call.1} parent=1 // pred_fallthru
      _
    // Predicated region
    $region18: #{tpu_custom_call.1} parent=1 // pred_check
      _
    $region19: #{tpu_custom_call.1} parent=1 // pred_check_branch
      %42 = sbr.rel (0) target = $region21
    $region20: #{tpu_custom_call.1} parent=1 // pred_region
      %43 = dma.done [#allocation4], 1024
    $region21: #{tpu_custom_call.1} parent=1 // pred_fallthru
      _
    // Predicated region
    $region22: #{tpu_custom_call.1} parent=1 // pred_check
      _
    $region23: #{tpu_custom_call.1} parent=1 // pred_check_branch
      %45 = sbr.rel (0) target = $region25
    $region24: #{tpu_custom_call.1} parent=1 // pred_region
      %46 = dma.done [#allocation7], 2048
    $region25: #{tpu_custom_call.1} parent=1 // pred_fallthru
      _
    %v47 = vld [vmem:[#allocation3] sm:$0xff]
    %v48 = vld [vmem:[#allocation3 + $0x8] sm:$0xff]
    %v49 = vld [vmem:[#allocation3 + $0x10] sm:$0xff]
    %v50 = vld [vmem:[#allocation3 + $0x18] sm:$0xff]
    %v51 = vld [vmem:[#allocation3 + $0x20] sm:$0xff]
    %v52 = vld [vmem:[#allocation3 + $0x28] sm:$0xff]
    %v53 = vld [vmem:[#allocation3 + $0x30] sm:$0xff]
    %v54 = vld [vmem:[#allocation3 + $0x38] sm:$0xff]
    %v55 = vld [vmem:[#allocation6] sm:$0xff]
    %v56 = vld [vmem:[#allocation6 + $0x8] sm:$0xff]
    %v57 = vld [vmem:[#allocation6 + $0x10] sm:$0xff]
    %v58 = vld [vmem:[#allocation6 + $0x18] sm:$0xff]
    %v59 = vld [vmem:[#allocation6 + $0x20] sm:$0xff]
    %v60 = vld [vmem:[#allocation6 + $0x28] sm:$0xff]
    %v61 = vld [vmem:[#allocation6 + $0x30] sm:$0xff]
    %v62 = vld [vmem:[#allocation6 + $0x38] sm:$0xff]
    %v63 = vld [vmem:[#allocation6 + $0x40] sm:$0xff]
    %v64 = vld [vmem:[#allocation6 + $0x48] sm:$0xff]
    %v65 = vld [vmem:[#allocation6 + $0x50] sm:$0xff]
    %v66 = vld [vmem:[#allocation6 + $0x58] sm:$0xff]
    %v67 = vld [vmem:[#allocation6 + $0x60] sm:$0xff]
    %v68 = vld [vmem:[#allocation6 + $0x68] sm:$0xff]
    %v69 = vld [vmem:[#allocation6 + $0x70] sm:$0xff]
    %v70 = vld [vmem:[#allocation6 + $0x78] sm:$0xff]
    %v71 = vld [vmem:[%s3] sm:$0x1]
    %v73 = vlaneseq
    %v74 = vshrl.u32 %v73, 7
    %v75 = vsub.s32 0, %v74
    %v76 = vrot.slane %v71, %v75
    %78 = vmatprep.subr.mxu0 0.0
    %79 = vmatpush1.msra.mxu0 %v55
    %80 = vmatprep.subr.mxu0 0.0
    %81 = vmatpush1.msra.mxu0 %v56
    %82 = vmatprep.subr.mxu0 0.0
    %83 = vmatpush1.msra.mxu0 %v57
    %84 = vmatprep.subr.mxu0 0.0
    %85 = vmatpush1.msra.mxu0 %v58
    %86 = vmatprep.subr.mxu0 0.0
    %87 = vmatpush1.msra.mxu0 %v59
    %88 = vmatprep.subr.mxu0 0.0
    %89 = vmatpush1.msra.mxu0 %v60
    %90 = vmatprep.subr.mxu0 0.0
    %91 = vmatpush1.msra.mxu0 %v61
    %92 = vmatprep.subr.mxu0 0.0
    %93 = vmatpush1.msra.mxu0 %v62
    %94 = vmatprep.subr.mxu0 0.0
    %95 = vmatpush1.msra.mxu0 %v63
    %96 = vmatprep.subr.mxu0 0.0
    %97 = vmatpush1.msra.mxu0 %v64
    %98 = vmatprep.subr.mxu0 0.0
    %99 = vmatpush1.msra.mxu0 %v65
    %100 = vmatprep.subr.mxu0 0.0
    %101 = vmatpush1.msra.mxu0 %v66
    %102 = vmatprep.subr.mxu0 0.0
    %103 = vmatpush1.msra.mxu0 %v67
    %104 = vmatprep.subr.mxu0 0.0
    %105 = vmatpush1.msra.mxu0 %v68
    %106 = vmatprep.subr.mxu0 0.0
    %107 = vmatpush1.msra.mxu0 %v69
    %108 = vmatprep.subr.mxu0 0.0
    %109 = vmatpush1.msra.mxu0 %v70
    %110 = vmatprep.subr.mxu0 0.0
    %111 = vmatpush1.msra.mxu0 0.0
    %112 = vmatprep.subr.mxu0 0.0
    %113 = vmatpush1.msra.mxu0 0.0
    %114 = vmatprep.subr.mxu0 0.0
    %115 = vmatpush1.msra.mxu0 0.0
    %116 = vmatprep.subr.mxu0 0.0
    %117 = vmatpush1.msra.mxu0 0.0
    %118 = vmatprep.subr.mxu0 0.0
    %119 = vmatpush1.msra.mxu0 0.0
    %120 = vmatprep.subr.mxu0 0.0
    %121 = vmatpush1.msra.mxu0 0.0
    %122 = vmatprep.subr.mxu0 0.0
    %123 = vmatpush1.msra.mxu0 0.0
    %124 = vmatprep.subr.mxu0 0.0
    %125 = vmatpush1.msra.mxu0 0.0
    %126 = vmatprep.subr.mxu0 0.0
    %127 = vmatpush1.msra.mxu0 0.0
    %128 = vmatprep.subr.mxu0 0.0
    %129 = vmatpush1.msra.mxu0 0.0
    %130 = vmatprep.subr.mxu0 0.0
    %131 = vmatpush1.msra.mxu0 0.0
    %132 = vmatprep.subr.mxu0 0.0
    %133 = vmatpush1.msra.mxu0 0.0
    %134 = vmatprep.subr.mxu0 0.0
    %135 = vmatpush1.msra.mxu0 0.0
    %136 = vmatprep.subr.mxu0 0.0
    %137 = vmatpush1.msra.mxu0 0.0
    %138 = vmatprep.subr.mxu0 0.0
    %139 = vmatpush1.msra.mxu0 0.0
    %140 = vmatprep.subr.mxu0 0.0
    %141 = vmatpush1.msra.mxu0 0.0
    %142 = vmatprep.mubr.f32.mxu0 0.0
    %143 = vmatmul.mubr.f32.gmra.mrb[0].mxu0 %v47
    %v144 = vpop.f32.mrb[0].mxu0
    %v145 = vadd.f32 %v76, %v144
    %v146 = vpop.f32.mrb[0].mxu0
    %147 = vmatprep.mubr.f32.mxu0 0.0
    %148 = vmatmul.mubr.f32.gmra.mrb[0].mxu0 %v48
    %v149 = vpop.f32.mrb[0].mxu0
    %v150 = vadd.f32 %v76, %v149
    %v151 = vpop.f32.mrb[0].mxu0
    %152 = vmatprep.mubr.f32.mxu0 0.0
    %153 = vmatmul.mubr.f32.gmra.mrb[0].mxu0 %v49
    %v154 = vpop.f32.mrb[0].mxu0
    %v155 = vadd.f32 %v76, %v154
    %v156 = vpop.f32.mrb[0].mxu0
    %157 = vmatprep.mubr.f32.mxu0 0.0
    %158 = vmatmul.mubr.f32.gmra.mrb[0].mxu0 %v50
    %v159 = vpop.f32.mrb[0].mxu0
    %v160 = vadd.f32 %v76, %v159
    %v161 = vpop.f32.mrb[0].mxu0
    %162 = vmatprep.mubr.f32.mxu0 0.0
    %163 = vmatmul.mubr.f32.gmra.mrb[0].mxu0 %v51
    %v164 = vpop.f32.mrb[0].mxu0
    %v165 = vadd.f32 %v76, %v164
    %v166 = vpop.f32.mrb[0].mxu0
    %167 = vmatprep.mubr.f32.mxu0 0.0
    %168 = vmatmul.mubr.f32.gmra.mrb[0].mxu0 %v52
    %v169 = vpop.f32.mrb[0].mxu0
    %v170 = vadd.f32 %v76, %v169
    %v171 = vpop.f32.mrb[0].mxu0
    %172 = vmatprep.mubr.f32.mxu0 0.0
    %173 = vmatmul.mubr.f32.gmra.mrb[0].mxu0 %v53
    %v174 = vpop.f32.mrb[0].mxu0
    %v175 = vadd.f32 %v76, %v174
    %v176 = vpop.f32.mrb[0].mxu0
    %177 = vmatprep.mubr.f32.mxu0 0.0
    %178 = vmatmul.mubr.f32.gmra.mrb[0].mxu0 %v54
    %v179 = vpop.f32.mrb[0].mxu0
    %v180 = vadd.f32 %v76, %v179
    %v181 = vpop.f32.mrb[0].mxu0
    %182 = vdwg.mxu0
    %s183 = sld [smem:[#allocation2]]
    %v184 = vtanh.pop %v145
    %v185 = vtanh.pop %v150
    %v186 = vtanh.pop %v155
    %v187 = vtanh.pop %v160
    %v188 = vtanh.pop %v165
    %v189 = vtanh.pop %v170
    %v190 = vtanh.pop %v175
    %v191 = vtanh.pop %v180
    %v192 = vstv %s183
    %v193 = vmul.f32 %v192, %v184
    %v194 = vmul.f32 %v192, %v185
    %v195 = vmul.f32 %v192, %v186
    %v196 = vmul.f32 %v192, %v187
    %v197 = vmul.f32 %v192, %v188
    %v198 = vmul.f32 %v192, %v189
    %v199 = vmul.f32 %v192, %v190
    %v200 = vmul.f32 %v192, %v191
    %v201 = vadd.f32 %v47, %v193
    %v202 = vadd.f32 %v48, %v194
    %v203 = vadd.f32 %v49, %v195
    %v204 = vadd.f32 %v50, %v196
    %v205 = vadd.f32 %v51, %v197
    %v206 = vadd.f32 %v52, %v198
    %v207 = vadd.f32 %v53, %v199
    %v208 = vadd.f32 %v54, %v200
    %209 = vst [vmem:[#allocation8] sm:$0xff] %v201
    %210 = vst [vmem:[#allocation8 + $0x8] sm:$0xff] %v202
    %211 = vst [vmem:[#allocation8 + $0x10] sm:$0xff] %v203
    %212 = vst [vmem:[#allocation8 + $0x18] sm:$0xff] %v204
    %213 = vst [vmem:[#allocation8 + $0x20] sm:$0xff] %v205
    %214 = vst [vmem:[#allocation8 + $0x28] sm:$0xff] %v206
    %215 = vst [vmem:[#allocation8 + $0x30] sm:$0xff] %v207
    %216 = vst [vmem:[#allocation8 + $0x38] sm:$0xff] %v208
    // Predicated region
    $region26: #{tpu_custom_call.1} parent=1 // pred_check
      _
    $region27: #{tpu_custom_call.1} parent=1 // pred_check_branch
      %218 = sbr.rel (0) target = $region29
    $region28: #{tpu_custom_call.1} parent=1 // pred_region
      %s220 = ssub.s32 1024, 1024
      %221 = vsyncadd [#allocation5], %s220
      %s222 = sshll.u32 [#allocation8], 4
      %s223 = int_to_ptr.vmem [resolvable:$true] %s222
      %228 = dma.vmem_to_hbm [thread:$0]  %s223, 1024, %s4, [#allocation5], 128, 128, 8
    $region29: #{tpu_custom_call.1} parent=1 // pred_fallthru
      _
    // Predicated region
    $region30: #{tpu_custom_call.1} parent=1 // pred_check
      _
    $region31: #{tpu_custom_call.1} parent=1 // pred_check_branch
      %230 = sbr.rel (0) target = $region33
    $region32: #{tpu_custom_call.1} parent=1 // pred_region
      %231 = dma.done [#allocation5], 1024
    $region33: #{tpu_custom_call.1} parent=1 // pred_fallthru
      _
    %232 = vsyncpa [#allocation4], 1
    %233 = vsyncpa [#allocation7], 1
    %234 = vsyncpa [#allocation5], 1

</llo_original>
